<compile_context>
chip_gen: v7x
topology: tpu7x:2x2x1
jax: 0.10.0
libtpu: 0.0.40
codegen_flags: <defaults>
</compile_context>

<pallas_src>
import jax
import jax.numpy as jnp
from jax import lax
from jax.experimental import pallas as pl
from jax.experimental.pallas import tpu as pltpu


def _round_up(n, m):
    return ((n + m - 1) // m) * m


def _pick_tb(B, block_b):
    """Batch tile size: single full-array block for tiny B, otherwise
    128-aligned tiles capped at ceil(B/2) so v7x's two cores both get work."""
    if B <= 128:
        return B
    tb = min(block_b, _round_up((B + 1) // 2, 128))
    return max(128, (tb // 128) * 128)


def prepare_params(params, compute_dtype=jnp.float32):
    """One-time prep: weights stay in PyTorch [out, in] layout (cast to the MXU
    compute dtype); biases become f32 [out, 1] columns for lane-broadcast."""
    w1 = params["fc1_w"].astype(compute_dtype)      # (U, I)
    w2 = params["fc2_w"].astype(compute_dtype)      # (U, U)
    w3 = params["fc3_w"].astype(compute_dtype)      # (A, U)
    b1 = params["fc1_b"].astype(jnp.float32).reshape(-1, 1)   # (U, 1)
    b2 = params["fc2_b"].astype(jnp.float32).reshape(-1, 1)   # (U, 1)
    b3 = params["fc3_b"].astype(jnp.float32).reshape(-1, 1)   # (A, 1)
    return w1, w2, w3, b1, b2, b3


def _dqn_kernel(x_ref, w1_ref, w2_ref, w3_ref, b1_ref, b2_ref, b3_ref, qt_ref):
    cdt = w1_ref.dtype                        # MXU compute dtype
    x = x_ref[...]                            # (tb, I), batch on sublanes
    if x.dtype != cdt:
        x = x.astype(cdt)

    # h1^T = relu(W1 @ x^T + b1): contract W1[U,I] axis 1 with x[tb,I] axis 1
    # -> (U, tb), lane-dense.  f32 accumulation; bias/ReLU in f32 (v5e-safe).
    h = lax.dot_general(w1_ref[...], x, (((1,), (1,)), ((), ())),
                        preferred_element_type=jnp.float32)
    h = jnp.maximum(h + b1_ref[...], 0.0)
    if cdt != jnp.float32:
        h = h.astype(cdt)

    # h2^T = relu(W2 @ h1^T + b2) -> (U, tb)
    h = jnp.dot(w2_ref[...], h, preferred_element_type=jnp.float32)
    h = jnp.maximum(h + b2_ref[...], 0.0)
    if cdt != jnp.float32:
        h = h.astype(cdt)

    # q^T = W3 @ h2^T + b3 -> (A, tb), lane-dense store.
    q = jnp.dot(w3_ref[...], h, preferred_element_type=jnp.float32)
    qt_ref[...] = (q + b3_ref[...]).astype(qt_ref.dtype)


def dqn_forward(x, w1, w2, w3, b1, b2, b3, *, block_b=8192):
    """x: [B, n_observations] -> q: [B, n_actions] (float32)."""
    B, I = x.shape
    U, I_w = w1.shape
    A = w3.shape[0]
    assert I_w == I, "x feature dim must equal n_observations"

    tb = _pick_tb(B, block_b)
    grid = (pl.cdiv(B, tb),)

    qt = pl.pallas_call(
        _dqn_kernel,
        grid=grid,
        in_specs=[
            # Activation stream: tiled over batch, auto double-buffered.
            pl.BlockSpec((tb, I), lambda i: (i, 0)),
            # Weights / biases: constant index_map -> DMA'd once, VMEM-resident.
            pl.BlockSpec(w1.shape, lambda i: (0, 0)),
            pl.BlockSpec(w2.shape, lambda i: (0, 0)),
            pl.BlockSpec(w3.shape, lambda i: (0, 0)),
            pl.BlockSpec(b1.shape, lambda i: (0, 0)),
            pl.BlockSpec(b2.shape, lambda i: (0, 0)),
            pl.BlockSpec(b3.shape, lambda i: (0, 0)),
        ],
        # q^T blocks: (A, tb) -> lane-dense stores along the batch axis.
        out_specs=pl.BlockSpec((A, tb), lambda i: (0, i)),
        out_shape=jax.ShapeDtypeStruct((A, B), jnp.float32),
        compiler_params=pltpu.CompilerParams(
            # Batch tiles are independent -> shard across v7x's 2 TensorCores.
            dimension_semantics=("parallel",),
        ),
    )(x, w1, w2, w3, b1, b2, b3)

    # Back to the PyTorch [B, n_actions] interface; (A, B) is tiny (A=4 rows).
    return qt.T


def init_params(key, n_observations, n_actions, units=32):
    """Deterministic synthetic params with PyTorch nn.Linear shapes (out, in)."""
    def linear(k, fan_out, fan_in):
        kw, kb = jax.random.split(k)
        bound = 1.0 / jnp.sqrt(fan_in)
        w = jax.random.uniform(kw, (fan_out, fan_in), jnp.float32, -bound, bound)
        b = jax.random.uniform(kb, (fan_out,), jnp.float32, -bound, bound)
        return w, b

    ks = jax.random.split(key, 3)
    p = {}
    p["fc1_w"], p["fc1_b"] = linear(ks[0], units, n_observations)
    p["fc2_w"], p["fc2_b"] = linear(ks[1], units, units)
    p["fc3_w"], p["fc3_b"] = linear(ks[2], n_actions, units)
    return p


def reference_forward(x, p):
    """Pure-JAX reference matching the PyTorch DQN.forward."""
    h = jax.nn.relu(x @ p["fc1_w"].T + p["fc1_b"])
    h = jax.nn.relu(h @ p["fc2_w"].T + p["fc2_b"])
    return h @ p["fc3_w"].T + p["fc3_b"]


if __name__ == "__main__":
    B, n_obs, n_act, units = 2, 8, 4, 32

    key = jax.random.PRNGKey(0)
    kx, kp, kx2 = jax.random.split(key, 3)
    x = jax.random.normal(kx, (B, n_obs), jnp.float32)
    params = init_params(kp, n_obs, n_act, units)

    # --- f32 end-to-end, tiny batch (single full-array block) ---
    prep = prepare_params(params, jnp.float32)
    q = jax.block_until_ready(dqn_forward(x, *prep))
    q_ref = reference_forward(x, params)
    assert q.shape == (B, n_act)
    assert jnp.allclose(q, q_ref, atol=1e-4, rtol=1e-4)

    # --- f32, larger batch: multi-step grid + partial final tile ---
    B2 = 300
    x2 = jax.random.normal(kx2, (B2, n_obs), jnp.float32)
    q2 = jax.block_until_ready(dqn_forward(x2, *prep))
    q2_ref = reference_forward(x2, params)
    assert q2.shape == (B2, n_act)
    assert jnp.allclose(q2, q2_ref, atol=1e-4, rtol=1e-4)

    # --- bf16 weights/MXU operands (f32 accumulation), same larger batch ---
    prep16 = prepare_params(params, jnp.bfloat16)
    q3 = jax.block_until_ready(dqn_forward(x2, *prep16, block_b=128))
    assert q3.shape == (B2, n_act)
    assert jnp.allclose(q3, q2_ref, atol=5e-2, rtol=5e-2)

    print("KERNEL_OK")
</pallas_src>

<mosaic_0001>
module attributes {stable_mosaic.version = 11 : i64} {
  func.func @_dqn_kernel(%arg0: i32, %arg1: memref<2x8xf32, #tpu.memory_space<vmem>>, %arg2: memref<32x8xf32, #tpu.memory_space<vmem>>, %arg3: memref<32x32xf32, #tpu.memory_space<vmem>>, %arg4: memref<4x32xf32, #tpu.memory_space<vmem>>, %arg5: memref<32x1xf32, #tpu.memory_space<vmem>>, %arg6: memref<32x1xf32, #tpu.memory_space<vmem>>, %arg7: memref<4x1xf32, #tpu.memory_space<vmem>>, %arg8: memref<4x2xf32, #tpu.memory_space<vmem>>) attributes {dimension_semantics = [#tpu.dimension_semantics<parallel>], iteration_bounds = array<i64: 1>, scalar_prefetch = 0 : i64, scratch_operands = 0 : i64, tpu.core_type = #tpu.core_type<tc>, window_params = [{transform_indices = @transform_0, window_bounds = array<i64: 2, 8>}, {pipeline_mode = #tpu.pipeline_mode<synchronous>, transform_indices = @transform_1, window_bounds = array<i64: 32, 8>}, {pipeline_mode = #tpu.pipeline_mode<synchronous>, transform_indices = @transform_2, window_bounds = array<i64: 32, 32>}, {pipeline_mode = #tpu.pipeline_mode<synchronous>, transform_indices = @transform_3, window_bounds = array<i64: 4, 32>}, {pipeline_mode = #tpu.pipeline_mode<synchronous>, transform_indices = @transform_4, window_bounds = array<i64: 32, 1>}, {pipeline_mode = #tpu.pipeline_mode<synchronous>, transform_indices = @transform_5, window_bounds = array<i64: 32, 1>}, {pipeline_mode = #tpu.pipeline_mode<synchronous>, transform_indices = @transform_6, window_bounds = array<i64: 4, 1>}, {transform_indices = @transform_7, window_bounds = array<i64: 4, 2>}]} {
    %c0 = arith.constant 0 : index
    %c0_0 = arith.constant 0 : index
    %0 = vector.load %arg1[%c0, %c0_0] : memref<2x8xf32, #tpu.memory_space<vmem>>, vector<2x8xf32>
    %c0_1 = arith.constant 0 : index
    %c0_2 = arith.constant 0 : index
    %1 = vector.load %arg2[%c0_1, %c0_2] : memref<32x8xf32, #tpu.memory_space<vmem>>, vector<32x8xf32>
    %cst = arith.constant dense<0.000000e+00> : vector<32x2xf32>
    %2 = tpu.matmul %1, %0, %cst {dimension_numbers = #tpu.dot_dimension_numbers<[1], [1], [0], [0], [0, 0, 1, 0], [], []>} : vector<32x8xf32>, vector<2x8xf32>, vector<32x2xf32> -> vector<32x2xf32>
    %c0_3 = arith.constant 0 : index
    %c0_4 = arith.constant 0 : index
    %3 = vector.load %arg5[%c0_3, %c0_4] : memref<32x1xf32, #tpu.memory_space<vmem>>, vector<32x1xf32>
    %4 = vector.broadcast %3 : vector<32x1xf32> to vector<32x2xf32>
    %5 = arith.addf %2, %4 : vector<32x2xf32>
    %cst_5 = arith.constant 0.000000e+00 : f32
    %6 = vector.broadcast %cst_5 : f32 to vector<32x2xf32>
    %7 = arith.maximumf %5, %6 : vector<32x2xf32>
    %c0_6 = arith.constant 0 : index
    %c0_7 = arith.constant 0 : index
    %8 = vector.load %arg3[%c0_6, %c0_7] : memref<32x32xf32, #tpu.memory_space<vmem>>, vector<32x32xf32>
    %cst_8 = arith.constant dense<0.000000e+00> : vector<32x2xf32>
    %9 = tpu.matmul %8, %7, %cst_8 {dimension_numbers = #tpu.dot_dimension_numbers<[1], [0], [0], [1], [0, 0, 1, 1], [], []>} : vector<32x32xf32>, vector<32x2xf32>, vector<32x2xf32> -> vector<32x2xf32>
    %c0_9 = arith.constant 0 : index
    %c0_10 = arith.constant 0 : index
    %10 = vector.load %arg6[%c0_9, %c0_10] : memref<32x1xf32, #tpu.memory_space<vmem>>, vector<32x1xf32>
    %11 = vector.broadcast %10 : vector<32x1xf32> to vector<32x2xf32>
    %12 = arith.addf %9, %11 : vector<32x2xf32>
    %cst_11 = arith.constant 0.000000e+00 : f32
    %13 = vector.broadcast %cst_11 : f32 to vector<32x2xf32>
    %14 = arith.maximumf %12, %13 : vector<32x2xf32>
    %c0_12 = arith.constant 0 : index
    %c0_13 = arith.constant 0 : index
    %15 = vector.load %arg4[%c0_12, %c0_13] : memref<4x32xf32, #tpu.memory_space<vmem>>, vector<4x32xf32>
    %cst_14 = arith.constant dense<0.000000e+00> : vector<4x2xf32>
    %16 = tpu.matmul %15, %14, %cst_14 {dimension_numbers = #tpu.dot_dimension_numbers<[1], [0], [0], [1], [0, 0, 1, 1], [], []>} : vector<4x32xf32>, vector<32x2xf32>, vector<4x2xf32> -> vector<4x2xf32>
    %c0_15 = arith.constant 0 : index
    %c0_16 = arith.constant 0 : index
    %17 = vector.load %arg7[%c0_15, %c0_16] : memref<4x1xf32, #tpu.memory_space<vmem>>, vector<4x1xf32>
    %18 = vector.broadcast %17 : vector<4x1xf32> to vector<4x2xf32>
    %19 = arith.addf %16, %18 : vector<4x2xf32>
    %c0_17 = arith.constant 0 : index
    %c0_18 = arith.constant 0 : index
    %20 = vector.load %arg8[%c0_17, %c0_18] : memref<4x2xf32, #tpu.memory_space<vmem>>, vector<4x2xf32>
    tpu.vector_store %arg8[%c0_17, %c0_18], %19 {strides = array<i32>} : memref<4x2xf32, #tpu.memory_space<vmem>>, vector<4x2xf32>,
    return
  }
  func.func @transform_0(%arg0: i32) -> (i32, i32) {
    %c0_i32 = arith.constant 0 : i32
    %c0_i32_0 = arith.constant 0 : i32
    return %arg0, %c0_i32 : i32, i32
  }
  func.func @transform_1(%arg0: i32) -> (i32, i32) {
    %c0_i32 = arith.constant 0 : i32
    %c0_i32_0 = arith.constant 0 : i32
    %c0_i32_1 = arith.constant 0 : i32
    return %c0_i32, %c0_i32_0 : i32, i32
  }
  func.func @transform_2(%arg0: i32) -> (i32, i32) {
    %c0_i32 = arith.constant 0 : i32
    %c0_i32_0 = arith.constant 0 : i32
    %c0_i32_1 = arith.constant 0 : i32
    return %c0_i32, %c0_i32_0 : i32, i32
  }
  func.func @transform_3(%arg0: i32) -> (i32, i32) {
    %c0_i32 = arith.constant 0 : i32
    %c0_i32_0 = arith.constant 0 : i32
    %c0_i32_1 = arith.constant 0 : i32
    return %c0_i32, %c0_i32_0 : i32, i32
  }
  func.func @transform_4(%arg0: i32) -> (i32, i32) {
    %c0_i32 = arith.constant 0 : i32
    %c0_i32_0 = arith.constant 0 : i32
    %c0_i32_1 = arith.constant 0 : i32
    return %c0_i32, %c0_i32_0 : i32, i32
  }
  func.func @transform_5(%arg0: i32) -> (i32, i32) {
    %c0_i32 = arith.constant 0 : i32
    %c0_i32_0 = arith.constant 0 : i32
    %c0_i32_1 = arith.constant 0 : i32
    return %c0_i32, %c0_i32_0 : i32, i32
  }
  func.func @transform_6(%arg0: i32) -> (i32, i32) {
    %c0_i32 = arith.constant 0 : i32
    %c0_i32_0 = arith.constant 0 : i32
    %c0_i32_1 = arith.constant 0 : i32
    return %c0_i32, %c0_i32_0 : i32, i32
  }
  func.func @transform_7(%arg0: i32) -> (i32, i32) {
    %c0_i32 = arith.constant 0 : i32
    %c0_i32_0 = arith.constant 0 : i32
    return %c0_i32, %arg0 : i32, i32
  }
}

</mosaic_0001>

<llo_original>
// kernel: tpu_custom_call.1
$region0: #{tpu_custom_call.1}
  #allocation0 [shape = 'u32[]', space=smem, size = 0x4, offset = 0x4, fixed_abs, tag = 'smem constant byte address 0x4 - core index']
  #allocation1 [shape = 'u32[144,128]{1,0:T(1,128)}', space=vmem, size = 0x12000, scoped, tag = 'internal scratch']
  %s0 = inlined_call_operand.vmem [shape: f32[2,8], index: 0, kind: input, shape index: {}]
  %s1 = inlined_call_operand.vmem [shape: f32[32,8], index: 1, kind: input, shape index: {}]
  %s2 = inlined_call_operand.vmem [shape: f32[32,32], index: 2, kind: input, shape index: {}]
  %s3 = inlined_call_operand.vmem [shape: f32[4,32], index: 3, kind: input, shape index: {}]
  %s4 = inlined_call_operand.vmem [shape: f32[32,1], index: 4, kind: input, shape index: {}]
  %s5 = inlined_call_operand.vmem [shape: f32[32,1], index: 5, kind: input, shape index: {}]
  %s6 = inlined_call_operand.vmem [shape: f32[4,1], index: 6, kind: input, shape index: {}]
  %s7 = inlined_call_operand.vmem [shape: f32[4,2], index: 7, kind: output, shape index: {}]
  %s8 = sld [smem:[#allocation0]]
  $region38: #{tpu_custom_call.1} parent=0
    _
  %s10 = ssub.s32 1, %s8
  %s11 = scalar_select 0, %s10, %s8
  // Predicated region
  $region2: #{tpu_custom_call.1} parent=0 // pred_check
    _
  $region3: #{tpu_custom_call.1} parent=0 // pred_check_branch
    %13 = sbr.rel (0) target = $region5
  $region4: #{tpu_custom_call.1} parent=0 // pred_region
    _
  $region5: #{tpu_custom_call.1} parent=0 // pred_fallthru
    _
  // Predicated region
  $region6: #{tpu_custom_call.1} parent=0 // pred_check
    _
  $region7: #{tpu_custom_call.1} parent=0 // pred_check_branch
    %15 = sbr.rel (0) target = $region9
  $region8: #{tpu_custom_call.1} parent=0 // pred_region
    _
  $region9: #{tpu_custom_call.1} parent=0 // pred_fallthru
    _
  // Predicated region
  $region10: #{tpu_custom_call.1} parent=0 // pred_check
    _
  $region11: #{tpu_custom_call.1} parent=0 // pred_check_branch
    %17 = sbr.rel (0) target = $region13
  $region12: #{tpu_custom_call.1} parent=0 // pred_region
    _
  $region13: #{tpu_custom_call.1} parent=0 // pred_fallthru
    _
  // Predicated region
  $region14: #{tpu_custom_call.1} parent=0 // pred_check
    _
  $region15: #{tpu_custom_call.1} parent=0 // pred_check_branch
    %19 = sbr.rel (0) target = $region17
  $region16: #{tpu_custom_call.1} parent=0 // pred_region
    _
  $region17: #{tpu_custom_call.1} parent=0 // pred_fallthru
    _
  // Predicated region
  $region18: #{tpu_custom_call.1} parent=0 // pred_check
    _
  $region19: #{tpu_custom_call.1} parent=0 // pred_check_branch
    %21 = sbr.rel (0) target = $region21
  $region20: #{tpu_custom_call.1} parent=0 // pred_region
    _
  $region21: #{tpu_custom_call.1} parent=0 // pred_fallthru
    _
  // Predicated region
  $region22: #{tpu_custom_call.1} parent=0 // pred_check
    _
  $region23: #{tpu_custom_call.1} parent=0 // pred_check_branch
    %23 = sbr.rel (0) target = $region25
  $region24: #{tpu_custom_call.1} parent=0 // pred_region
    _
  $region25: #{tpu_custom_call.1} parent=0 // pred_fallthru
    _
  // Predicated region
  $region26: #{tpu_custom_call.1} parent=0 // pred_check
    _
  $region27: #{tpu_custom_call.1} parent=0 // pred_check_branch
    %25 = sbr.rel (0) target = $region29
  $region28: #{tpu_custom_call.1} parent=0 // pred_region
    _
  $region29: #{tpu_custom_call.1} parent=0 // pred_fallthru
    _
  %v26 = vld [vmem:[%s0] sm:$0x3]
  %v27 = vld [vmem:[%s1] sm:$0xff]
  %v28 = vld [vmem:[%s1 + $0x8] sm:$0xff]
  %v29 = vld [vmem:[%s1 + $0x10] sm:$0xff]
  %v30 = vld [vmem:[%s1 + $0x18] sm:$0xff]
  %v31 = vld [vmem:[%s4] sm:$0xff]
  %v32 = vld [vmem:[%s4 + $0x8] sm:$0xff]
  %v33 = vld [vmem:[%s4 + $0x10] sm:$0xff]
  %v34 = vld [vmem:[%s4 + $0x18] sm:$0xff]
  %36 = vset.pattern.permute.xlu0 0
  %37 = vperm.xlu0 %36, %v31
  %v38 = vpop.permute.xlu0 %37
  %41 = vset.pattern.permute.xlu0 0
  %42 = vperm.xlu0 %41, %v32
  %v43 = vpop.permute.xlu0 %42
  %46 = vset.pattern.permute.xlu0 0
  %47 = vperm.xlu0 %46, %v33
  %v48 = vpop.permute.xlu0 %47
  %51 = vset.pattern.permute.xlu0 0
  %52 = vperm.xlu0 %51, %v34
  %v53 = vpop.permute.xlu0 %52
  %vm55 = vcmask 64512
  %v57 = vsel %vm55, %v27, 0
  %v60 = vsel %vm55, %v28, 0
  %v63 = vsel %vm55, %v29, 0
  %v66 = vsel %vm55, %v30, 0
  %v69 = vsel %vm55, %v26, 0
  %71 = vmatprep.subr.mxu0 0.0
  %72 = vmatpush1.xpose.msra.mxu0 %v69
  %73 = vmatprep.subr.mxu0 0.0
  %74 = vmatpush1.xpose.msra.mxu0 0.0
  %75 = vmatprep.subr.mxu0 0.0
  %76 = vmatpush1.xpose.msra.mxu0 0.0
  %77 = vmatprep.subr.mxu0 0.0
  %78 = vmatpush1.xpose.msra.mxu0 0.0
  %79 = vmatprep.subr.mxu0 0.0
  %80 = vmatpush1.xpose.msra.mxu0 0.0
  %81 = vmatprep.subr.mxu0 0.0
  %82 = vmatpush1.xpose.msra.mxu0 0.0
  %83 = vmatprep.subr.mxu0 0.0
  %84 = vmatpush1.xpose.msra.mxu0 0.0
  %85 = vmatprep.subr.mxu0 0.0
  %86 = vmatpush1.xpose.msra.mxu0 0.0
  %87 = vmatprep.subr.mxu0 0.0
  %88 = vmatpush1.xpose.msra.mxu0 0.0
  %89 = vmatprep.subr.mxu0 0.0
  %90 = vmatpush1.xpose.msra.mxu0 0.0
  %91 = vmatprep.subr.mxu0 0.0
  %92 = vmatpush1.xpose.msra.mxu0 0.0
  %93 = vmatprep.subr.mxu0 0.0
  %94 = vmatpush1.xpose.msra.mxu0 0.0
  %95 = vmatprep.subr.mxu0 0.0
  %96 = vmatpush1.xpose.msra.mxu0 0.0
  %97 = vmatprep.subr.mxu0 0.0
  %98 = vmatpush1.xpose.msra.mxu0 0.0
  %99 = vmatprep.subr.mxu0 0.0
  %100 = vmatpush1.xpose.msra.mxu0 0.0
  %101 = vmatprep.subr.mxu0 0.0
  %102 = vmatpush1.xpose.msra.mxu0 0.0
  %103 = vmatprep.subr.mxu0 0.0
  %104 = vmatpush1.xpose.msra.mxu0 0.0
  %105 = vmatprep.subr.mxu0 0.0
  %106 = vmatpush1.xpose.msra.mxu0 0.0
  %107 = vmatprep.subr.mxu0 0.0
  %108 = vmatpush1.xpose.msra.mxu0 0.0
  %109 = vmatprep.subr.mxu0 0.0
  %110 = vmatpush1.xpose.msra.mxu0 0.0
  %111 = vmatprep.subr.mxu0 0.0
  %112 = vmatpush1.xpose.msra.mxu0 0.0
  %113 = vmatprep.subr.mxu0 0.0
  %114 = vmatpush1.xpose.msra.mxu0 0.0
  %115 = vmatprep.subr.mxu0 0.0
  %116 = vmatpush1.xpose.msra.mxu0 0.0
  %117 = vmatprep.subr.mxu0 0.0
  %118 = vmatpush1.xpose.msra.mxu0 0.0
  %119 = vmatprep.subr.mxu0 0.0
  %120 = vmatpush1.xpose.msra.mxu0 0.0
  %121 = vmatprep.subr.mxu0 0.0
  %122 = vmatpush1.xpose.msra.mxu0 0.0
  %123 = vmatprep.subr.mxu0 0.0
  %124 = vmatpush1.xpose.msra.mxu0 0.0
  %125 = vmatprep.subr.mxu0 0.0
  %126 = vmatpush1.xpose.msra.mxu0 0.0
  %127 = vmatprep.subr.mxu0 0.0
  %128 = vmatpush1.xpose.msra.mxu0 0.0
  %129 = vmatprep.subr.mxu0 0.0
  %130 = vmatpush1.xpose.msra.mxu0 0.0
  %131 = vmatprep.subr.mxu0 0.0
  %132 = vmatpush1.xpose.msra.mxu0 0.0
  %133 = vmatprep.subr.mxu0 0.0
  %134 = vmatpush1.xpose.msra.mxu0 0.0
  %135 = vmatprep.mubr.f32.mxu0 0.0
  %136 = vmatmul.mubr.f32.gmra.mrb[0].mxu0 %v57
  %v137 = vpop.f32.mrb[0].mxu0
  %v138 = vadd.f32 %v38, %v137
  %v139 = vpop.f32.mrb[0].mxu0
  %140 = vmatprep.mubr.f32.mxu0 0.0
  %141 = vmatmul.mubr.f32.gmra.mrb[0].mxu0 %v60
  %v142 = vpop.f32.mrb[0].mxu0
  %v143 = vadd.f32 %v43, %v142
  %v144 = vpop.f32.mrb[0].mxu0
  %145 = vmatprep.mubr.f32.mxu0 0.0
  %146 = vmatmul.mubr.f32.gmra.mrb[0].mxu0 %v63
  %v147 = vpop.f32.mrb[0].mxu0
  %v148 = vadd.f32 %v48, %v147
  %v149 = vpop.f32.mrb[0].mxu0
  %150 = vmatprep.mubr.f32.mxu0 0.0
  %151 = vmatmul.mubr.f32.gmra.mrb[0].mxu0 %v66
  %v152 = vpop.f32.mrb[0].mxu0
  %v153 = vadd.f32 %v53, %v152
  %v154 = vpop.f32.mrb[0].mxu0
  %155 = vdwg.mxu0
  %v156 = vmax.f32 %v138, 0.0
  %v157 = vmax.f32 %v143, 0.0
  %v158 = vmax.f32 %v148, 0.0
  %v159 = vmax.f32 %v153, 0.0
  %v160 = vld [vmem:[%s2] sm:$0xff]
  %v161 = vld [vmem:[%s2 + $0x8] sm:$0xff]
  %v162 = vld [vmem:[%s2 + $0x10] sm:$0xff]
  %v163 = vld [vmem:[%s2 + $0x18] sm:$0xff]
  %v164 = vld [vmem:[%s5] sm:$0xff]
  %v165 = vld [vmem:[%s5 + $0x8] sm:$0xff]
  %v166 = vld [vmem:[%s5 + $0x10] sm:$0xff]
  %v167 = vld [vmem:[%s5 + $0x18] sm:$0xff]
  %169 = vset.pattern.permute.xlu0 0
  %170 = vperm.xlu0 %169, %v164
  %v171 = vpop.permute.xlu0 %170
  %174 = vset.pattern.permute.xlu0 0
  %175 = vperm.xlu0 %174, %v165
  %v176 = vpop.permute.xlu0 %175
  %179 = vset.pattern.permute.xlu0 0
  %180 = vperm.xlu0 %179, %v166
  %v181 = vpop.permute.xlu0 %180
  %184 = vset.pattern.permute.xlu0 0
  %185 = vperm.xlu0 %184, %v167
  %v186 = vpop.permute.xlu0 %185
  %vm188 = vcmask 261120
  %v190 = vsel %vm188, %v160, 0
  %v193 = vsel %vm188, %v161, 0
  %v196 = vsel %vm188, %v162, 0
  %v199 = vsel %vm188, %v163, 0
  %201 = vmatprep.subr.mxu0 0.0
  %202 = vmatpush1.msra.mxu0 %v156
  %203 = vmatprep.subr.mxu0 0.0
  %204 = vmatpush1.msra.mxu0 %v157
  %205 = vmatprep.subr.mxu0 0.0
  %206 = vmatpush1.msra.mxu0 %v158
  %207 = vmatprep.subr.mxu0 0.0
  %208 = vmatpush1.msra.mxu0 %v159
  %209 = vmatprep.subr.mxu0 0.0
  %210 = vmatpush1.msra.mxu0 0.0
  %211 = vmatprep.subr.mxu0 0.0
  %212 = vmatpush1.msra.mxu0 0.0
  %213 = vmatprep.subr.mxu0 0.0
  %214 = vmatpush1.msra.mxu0 0.0
  %215 = vmatprep.subr.mxu0 0.0
  %216 = vmatpush1.msra.mxu0 0.0
  %217 = vmatprep.subr.mxu0 0.0
  %218 = vmatpush1.msra.mxu0 0.0
  %219 = vmatprep.subr.mxu0 0.0
  %220 = vmatpush1.msra.mxu0 0.0
  %221 = vmatprep.subr.mxu0 0.0
  %222 = vmatpush1.msra.mxu0 0.0
  %223 = vmatprep.subr.mxu0 0.0
  %224 = vmatpush1.msra.mxu0 0.0
  %225 = vmatprep.subr.mxu0 0.0
  %226 = vmatpush1.msra.mxu0 0.0
  %227 = vmatprep.subr.mxu0 0.0
  %228 = vmatpush1.msra.mxu0 0.0
  %229 = vmatprep.subr.mxu0 0.0
  %230 = vmatpush1.msra.mxu0 0.0
  %231 = vmatprep.subr.mxu0 0.0
  %232 = vmatpush1.msra.mxu0 0.0
  %233 = vmatprep.subr.mxu0 0.0
  %234 = vmatpush1.msra.mxu0 0.0
  %235 = vmatprep.subr.mxu0 0.0
  %236 = vmatpush1.msra.mxu0 0.0
  %237 = vmatprep.subr.mxu0 0.0
  %238 = vmatpush1.msra.mxu0 0.0
  %239 = vmatprep.subr.mxu0 0.0
  %240 = vmatpush1.msra.mxu0 0.0
  %241 = vmatprep.subr.mxu0 0.0
  %242 = vmatpush1.msra.mxu0 0.0
  %243 = vmatprep.subr.mxu0 0.0
  %244 = vmatpush1.msra.mxu0 0.0
  %245 = vmatprep.subr.mxu0 0.0
  %246 = vmatpush1.msra.mxu0 0.0
  %247 = vmatprep.subr.mxu0 0.0
  %248 = vmatpush1.msra.mxu0 0.0
  %249 = vmatprep.subr.mxu0 0.0
  %250 = vmatpush1.msra.mxu0 0.0
  %251 = vmatprep.subr.mxu0 0.0
  %252 = vmatpush1.msra.mxu0 0.0
  %253 = vmatprep.subr.mxu0 0.0
  %254 = vmatpush1.msra.mxu0 0.0
  %255 = vmatprep.subr.mxu0 0.0
  %256 = vmatpush1.msra.mxu0 0.0
  %257 = vmatprep.subr.mxu0 0.0
  %258 = vmatpush1.msra.mxu0 0.0
  %259 = vmatprep.subr.mxu0 0.0
  %260 = vmatpush1.msra.mxu0 0.0
  %261 = vmatprep.subr.mxu0 0.0
  %262 = vmatpush1.msra.mxu0 0.0
  %263 = vmatprep.subr.mxu0 0.0
  %264 = vmatpush1.msra.mxu0 0.0
  %265 = vmatprep.mubr.f32.mxu0 0.0
  %266 = vmatmul.mubr.f32.gmra.mrb[0].mxu0 %v190
  %v267 = vpop.f32.mrb[0].mxu0
  %v268 = vadd.f32 %v171, %v267
  %v269 = vpop.f32.mrb[0].mxu0
  %270 = vmatprep.mubr.f32.mxu0 0.0
  %271 = vmatmul.mubr.f32.gmra.mrb[0].mxu0 %v193
  %v272 = vpop.f32.mrb[0].mxu0
  %v273 = vadd.f32 %v176, %v272
  %v274 = vpop.f32.mrb[0].mxu0
  %275 = vmatprep.mubr.f32.mxu0 0.0
  %276 = vmatmul.mubr.f32.gmra.mrb[0].mxu0 %v196
  %v277 = vpop.f32.mrb[0].mxu0
  %v278 = vadd.f32 %v181, %v277
  %v279 = vpop.f32.mrb[0].mxu0
  %280 = vmatprep.mubr.f32.mxu0 0.0
  %281 = vmatmul.mubr.f32.gmra.mrb[0].mxu0 %v199
  %v282 = vpop.f32.mrb[0].mxu0
  %v283 = vadd.f32 %v186, %v282
  %v284 = vpop.f32.mrb[0].mxu0
  %285 = vdwg.mxu0
  %v286 = vmax.f32 %v268, 0.0
  %v287 = vmax.f32 %v273, 0.0
  %v288 = vmax.f32 %v278, 0.0
  %v289 = vmax.f32 %v283, 0.0
  %v290 = vld [vmem:[%s3] sm:$0xf]
  %v291 = vld [vmem:[%s6] sm:$0xf]
  %293 = vset.pattern.permute.xlu0 0
  %294 = vperm.xlu0 %293, %v291
  %v295 = vpop.permute.xlu0 %294
  %v298 = vsel %vm188, %v290, 0
  %300 = vmatprep.subr.mxu0 0.0
  %301 = vmatpush1.msra.mxu0 %v286
  %302 = vmatprep.subr.mxu0 0.0
  %303 = vmatpush1.msra.mxu0 %v287
  %304 = vmatprep.subr.mxu0 0.0
  %305 = vmatpush1.msra.mxu0 %v288
  %306 = vmatprep.subr.mxu0 0.0
  %307 = vmatpush1.msra.mxu0 %v289
  %308 = vmatprep.subr.mxu0 0.0
  %309 = vmatpush1.msra.mxu0 0.0
  %310 = vmatprep.subr.mxu0 0.0
  %311 = vmatpush1.msra.mxu0 0.0
  %312 = vmatprep.subr.mxu0 0.0
  %313 = vmatpush1.msra.mxu0 0.0
  %314 = vmatprep.subr.mxu0 0.0
  %315 = vmatpush1.msra.mxu0 0.0
  %316 = vmatprep.subr.mxu0 0.0
  %317 = vmatpush1.msra.mxu0 0.0
  %318 = vmatprep.subr.mxu0 0.0
  %319 = vmatpush1.msra.mxu0 0.0
  %320 = vmatprep.subr.mxu0 0.0
  %321 = vmatpush1.msra.mxu0 0.0
  %322 = vmatprep.subr.mxu0 0.0
  %323 = vmatpush1.msra.mxu0 0.0
  %324 = vmatprep.subr.mxu0 0.0
  %325 = vmatpush1.msra.mxu0 0.0
  %326 = vmatprep.subr.mxu0 0.0
  %327 = vmatpush1.msra.mxu0 0.0
  %328 = vmatprep.subr.mxu0 0.0
  %329 = vmatpush1.msra.mxu0 0.0
  %330 = vmatprep.subr.mxu0 0.0
  %331 = vmatpush1.msra.mxu0 0.0
  %332 = vmatprep.subr.mxu0 0.0
  %333 = vmatpush1.msra.mxu0 0.0
  %334 = vmatprep.subr.mxu0 0.0
  %335 = vmatpush1.msra.mxu0 0.0
  %336 = vmatprep.subr.mxu0 0.0
  %337 = vmatpush1.msra.mxu0 0.0
  %338 = vmatprep.subr.mxu0 0.0
  %339 = vmatpush1.msra.mxu0 0.0
  %340 = vmatprep.subr.mxu0 0.0
  %341 = vmatpush1.msra.mxu0 0.0
  %342 = vmatprep.subr.mxu0 0.0
  %343 = vmatpush1.msra.mxu0 0.0
  %344 = vmatprep.subr.mxu0 0.0
  %345 = vmatpush1.msra.mxu0 0.0
  %346 = vmatprep.subr.mxu0 0.0
  %347 = vmatpush1.msra.mxu0 0.0
  %348 = vmatprep.subr.mxu0 0.0
  %349 = vmatpush1.msra.mxu0 0.0
  %350 = vmatprep.subr.mxu0 0.0
  %351 = vmatpush1.msra.mxu0 0.0
  %352 = vmatprep.subr.mxu0 0.0
  %353 = vmatpush1.msra.mxu0 0.0
  %354 = vmatprep.subr.mxu0 0.0
  %355 = vmatpush1.msra.mxu0 0.0
  %356 = vmatprep.subr.mxu0 0.0
  %357 = vmatpush1.msra.mxu0 0.0
  %358 = vmatprep.subr.mxu0 0.0
  %359 = vmatpush1.msra.mxu0 0.0
  %360 = vmatprep.subr.mxu0 0.0
  %361 = vmatpush1.msra.mxu0 0.0
  %362 = vmatprep.subr.mxu0 0.0
  %363 = vmatpush1.msra.mxu0 0.0
  %364 = vmatprep.mubr.f32.mxu0 0.0
  %365 = vmatmul.mubr.f32.gmra.mrb[0].mxu0 %v298
  %v366 = vpop.f32.mrb[0].mxu0
  %v367 = vadd.f32 %v295, %v366
  %v368 = vpop.f32.mrb[0].mxu0
  %369 = vdwg.mxu0
  %vm370 = vcmask 11264
  %371 = vst.msk [vmem:[%s7] sm:$0xf] %vm370, %v367
  // Predicated region
  $region30: #{tpu_custom_call.1} parent=0 // pred_check
    _
  $region31: #{tpu_custom_call.1} parent=0 // pred_check_branch
    %373 = sbr.rel (0) target = $region33
  $region32: #{tpu_custom_call.1} parent=0 // pred_region
    _
  $region33: #{tpu_custom_call.1} parent=0 // pred_fallthru
    _
  // Predicated region
  $region34: #{tpu_custom_call.1} parent=0 // pred_check
    _
  $region35: #{tpu_custom_call.1} parent=0 // pred_check_branch
    %375 = sbr.rel (0) target = $region37
  $region36: #{tpu_custom_call.1} parent=0 // pred_region
    _
  $region37: #{tpu_custom_call.1} parent=0 // pred_fallthru
    _

</llo_original>
